<compile_context>
chip_gen: v5e
topology: v5e:2x2
jax: 0.10.0
libtpu: 0.0.40
codegen_flags: <defaults>
</compile_context>

<pallas_src>
import functools

import jax
import jax.numpy as jnp
from jax import lax
from jax.experimental import pallas as pl
from jax.experimental.pallas import tpu as pltpu


def _round_up(x, m):
    return -(-x // m) * m


def _cdiv(a, b):
    return -(-a // b)


def _tcn_kernel(x_ref, xh_ref, w_ref, wd_ref, b_ref, bd_ref, o_ref,
                col_ref, carry_ref, *, dilation, kernel_size, pad, cin, cout, n_chunk):
    # x_ref    : (1, Cin, TL)     current time tile (channels on sublanes, time on lanes)
    # xh_ref   : (1, Cin, TL)     halo tile = tile just before this split's first tile
    # w_ref    : (Cout, K*Cin)    conv weight in matmul layout (column block m <-> x[t - m*d])
    # wd_ref   : (Cout, Cin)      residual 1x1 weight
    # b_ref    : (Cout, 1) f32    conv bias;  bd_ref: (Cout, 1) f32 residual bias
    # o_ref    : (1, Cout, TL)
    # col_ref  : (K*Cin, TL)      im2col staging (VMEM scratch)
    # carry_ref: (Cin, max(pad,1)) carried causal left context (VMEM scratch)
    s = pl.program_id(0)    # sequence-split index (parallel)
    ti = pl.program_id(2)   # time-tile index within this split (sequential)
    tl = o_ref.shape[2]
    d, k = dilation, kernel_size

    # ---- causal left context for the first tile of each (split, batch) ------------------
    if pad > 0:
        @pl.when(ti == 0)
        def _init_carry():
            @pl.when(s == 0)
            def _():  # true start of the sequence: zero context (causal padding)
                carry_ref[...] = jnp.zeros(carry_ref.shape, carry_ref.dtype)

            @pl.when(s > 0)
            def _():  # split boundary: halo tile re-read from HBM
                carry_ref[...] = xh_ref[0, :, tl - pad:tl]

    # ---- im2col staging: row block m holds x[t - m*d] over the tile's time range --------
    # tap 0 (also the residual input) is the tile itself: one aligned full-tile copy.
    col_ref[0:cin, :] = x_ref[0, :, :]
    for m in range(1, k):                              # static tap loop (offsets are constants)
        off = m * d                                    # off <= pad <= TL by construction
        col_ref[m * cin:(m + 1) * cin, 0:off] = carry_ref[:, pad - off:pad]
        if off < tl:
            col_ref[m * cin:(m + 1) * cin, off:tl] = x_ref[0, :, 0:tl - off]

    # carry the most recent `pad` time steps for the next tile of this (split, batch)
    if pad > 0:
        carry_ref[...] = x_ref[0, :, tl - pad:tl]

    # ---- single deep matmul (contraction K*Cin) per lane chunk + fused epilogue ---------
    w = w_ref[...]                                     # (Cout, K*Cin)
    wd = wd_ref[...]                                   # (Cout, Cin)
    b_bc = jnp.broadcast_to(b_ref[...], (cout, n_chunk))    # hoisted out of the chunk loop
    bd_bc = jnp.broadcast_to(bd_ref[...], (cout, n_chunk))
    n_chunks = tl // n_chunk

    def chunk_body(c, carry_unused):
        off = pl.multiple_of(c * n_chunk, n_chunk)
        xs = col_ref[:, pl.ds(off, n_chunk)]                      # (K*Cin, NC)
        x0 = x_ref[0, :, pl.ds(off, n_chunk)]                     # (Cin,   NC)
        conv = jnp.dot(w, xs, preferred_element_type=jnp.float32)  # (Cout, NC) f32
        res = jnp.dot(wd, x0, preferred_element_type=jnp.float32)  # (Cout, NC) f32
        # TODO(synk): dropout is identity here (eval / inference semantics); stochastic
        # training-mode dropout is not implemented in-kernel.
        out = jnp.maximum(conv + b_bc, 0.0) + (res + bd_bc)
        o_ref[0, :, pl.ds(off, n_chunk)] = out.astype(o_ref.dtype)
        return carry_unused

    lax.fori_loop(0, n_chunks, chunk_body, 0, unroll=(n_chunks <= 8))


@functools.partial(jax.jit,
                   static_argnames=("dilation", "time_tile", "seq_splits",
                                    "compute_dtype", "vmem_budget_mib"))
def tcn_block(x, w, b, wd=None, bd=None, *, dilation, time_tile=None, seq_splits=None,
              compute_dtype=None, vmem_budget_mib=24):
    """x: (B, Cin, L); w: (Cout, Cin, K); b: (Cout,); wd: (Cout, Cin) | None; bd: (Cout,) | None.
    Returns (B, Cout, L), matching PyTorch TCNBlock.forward (dropout in eval mode)."""
    B, cin, L = x.shape
    cout, cin_w, K = w.shape
    assert cin_w == cin, (cin_w, cin)
    pad = (K - 1) * dilation

    if wd is None:
        # PyTorch only uses the identity residual when in_channels == out_channels.
        assert cin == cout, "wd=None (identity residual) requires in_channels == out_channels"
        wd = jnp.eye(cout, dtype=w.dtype)
    if bd is None:
        bd = jnp.zeros((cout,), dtype=b.dtype)

    cdt = jnp.dtype(compute_dtype) if compute_dtype is not None else jnp.dtype(x.dtype)
    out_dtype = x.dtype
    isz = cdt.itemsize
    osz = jnp.dtype(out_dtype).itemsize

    # ---- time tile: multiple of 128 lanes, >= causal context, fits the VMEM budget.
    # Default budget (24 MiB) is derived for v7x (64 MiB physical / 32 MiB scoped); raise
    # vmem_budget_mib on v5e/v6e (128 MiB VMEM) for even larger tiles if desired.
    budget = int(vmem_budget_mib) << 20
    fixed = (2 * (K + 1) * cout * cin * isz               # weights, double-buffered
             + 4 * cout * 128 * 4                         # biases (lane-padded), double-buffered
             + cin * _round_up(max(pad, 1), 128) * isz    # carry scratch
             + (256 << 10))                               # slack
    per_lane = (4 + K) * cin * isz + 2 * cout * osz       # 2x x-tile + 2x halo + im2col + 2x out
    tl_cap = max(128, ((budget - fixed) // per_lane) // 128 * 128)
    if time_tile is None:
        TL = min(tl_cap, 4096)
    else:
        TL = min(_round_up(time_tile, 128), tl_cap)
    TL = min(TL, _round_up(L, 128))
    TL = max(TL, _round_up(max(pad, 1), 128), 128)        # carry must fit inside one tile

    # ---- sequence splits: extra parallel grid axis so both v7x TensorCores stay busy at
    # small/odd batch; each split re-reads one halo tile from HBM instead of carrying.
    if seq_splits is None:
        S = 1 if B % 2 == 0 else 2
    else:
        S = max(1, int(seq_splits))
    S = max(1, min(S, _cdiv(L, TL)))

    Lp = _round_up(L, TL * S)
    nt = Lp // TL
    nt_ps = nt // S

    xw = x if Lp == L else jnp.pad(x, ((0, 0), (0, 0), (0, Lp - L)))
    if cdt != xw.dtype:
        xw = xw.astype(cdt)

    # Conv weight in matmul layout: column block m multiplies x[t - m*d] (tap m <-> w[:, :, K-1-m]).
    # The residual 1x1 stays a separate (Cout, Cin) weight (no zero-padded rows).
    w_mat = w[:, :, ::-1].transpose(0, 2, 1).reshape(cout, K * cin).astype(cdt)
    wd_m = wd.astype(cdt)
    b_col = b.astype(jnp.float32).reshape(cout, 1)
    bd_col = bd.astype(jnp.float32).reshape(cout, 1)

    # Lane chunk for the in-kernel N loop: bounds live f32 accumulator vregs.
    NC = 256 if (cout <= 64 and TL % 256 == 0) else 128

    kernel = functools.partial(_tcn_kernel, dilation=dilation, kernel_size=K,
                               pad=pad, cin=cin, cout=cout, n_chunk=NC)

    # Real VMEM footprint (double-buffered tiles + grid-invariant weights + scratch).
    vmem_bytes = (2 * cin * TL * isz          # current x tile
                  + 2 * cin * TL * isz        # halo tile
                  + 2 * cout * TL * osz       # output tile
                  + K * cin * TL * isz        # im2col scratch
                  + fixed)
    vmem_limit = int(min(max(vmem_bytes * 3 // 2 + (2 << 20), 32 << 20), 112 << 20))

    cost = pl.CostEstimate(
        flops=int(2 * B * Lp * cout * cin * (K + 1)),     # conv (K*Cin) + residual (Cin)
        transcendentals=0,
        bytes_accessed=int(B * (cin * Lp + S * cin * TL) * isz
                           + B * cout * Lp * osz
                           + (K + 1) * cout * cin * isz + 2 * cout * 4),
    )

    out = pl.pallas_call(
        kernel,
        out_shape=jax.ShapeDtypeStruct((B, cout, Lp), out_dtype),
        grid_spec=pltpu.PrefetchScalarGridSpec(
            num_scalar_prefetch=0,
            grid=(S, B, nt_ps),
            in_specs=[
                # current time tile
                pl.BlockSpec((1, cin, TL), lambda s, bi, ti: (bi, 0, s * nt_ps + ti)),
                # halo tile (only read at ti == 0 and s > 0; constant across ti -> fetched once)
                pl.BlockSpec((1, cin, TL),
                             lambda s, bi, ti: (bi, 0, jnp.maximum(s * nt_ps - 1, 0))),
                pl.BlockSpec((cout, K * cin), lambda s, bi, ti: (0, 0)),
                pl.BlockSpec((cout, cin), lambda s, bi, ti: (0, 0)),
                pl.BlockSpec((cout, 1), lambda s, bi, ti: (0, 0)),
                pl.BlockSpec((cout, 1), lambda s, bi, ti: (0, 0)),
            ],
            out_specs=pl.BlockSpec((1, cout, TL),
                                   lambda s, bi, ti: (bi, 0, s * nt_ps + ti)),
            scratch_shapes=[
                pltpu.VMEM((K * cin, TL), cdt),            # im2col staging
                pltpu.VMEM((cin, max(pad, 1)), cdt),       # carried causal context
            ],
        ),
        compiler_params=pltpu.CompilerParams(
            dimension_semantics=("parallel", "parallel", "arbitrary"),
            vmem_limit_bytes=vmem_limit,
        ),
        cost_estimate=cost,
    )(xw, xw, w_mat, wd_m, b_col, bd_col)

    return out if Lp == L else out[:, :, :L]


def _reference(x, w, b, wd, bd, *, dilation):
    # Independent reference using lax.conv_general_dilated (NCL layout).
    K = w.shape[-1]
    pad = (K - 1) * dilation
    conv = jax.lax.conv_general_dilated(
        x, w, window_strides=(1,), padding=[(pad, 0)],
        rhs_dilation=(dilation,), dimension_numbers=("NCH", "OIH", "NCH"))
    conv = conv + b[None, :, None]
    out = jnp.maximum(conv, 0.0)
    res = jax.lax.conv_general_dilated(
        x, wd[:, :, None], window_strides=(1,), padding=[(0, 0)],
        dimension_numbers=("NCH", "OIH", "NCH")) + bd[None, :, None]
    return out + res


if __name__ == "__main__":
    key = jax.random.PRNGKey(0)
    kx, kv, kg, kb, kwd, kbd, kx2, kx3, kv3, kg3, kb3 = jax.random.split(key, 11)

    # --- Test 1: small shapes from the module spec (batch=2, Cin=4, Cout=8, L=16, K=3, d=2) ---
    B, CIN, COUT, L, K, D = 2, 4, 8, 16, 3, 2
    x = jax.random.normal(kx, (B, CIN, L), dtype=jnp.float32)

    # weight_norm parametrization: w = g * v / ||v|| (norm over (Cin, K) per output channel).
    v = 0.3 * jax.random.normal(kv, (COUT, CIN, K), dtype=jnp.float32)
    g = 1.0 + 0.1 * jax.random.normal(kg, (COUT,), dtype=jnp.float32)
    w = g[:, None, None] * v / jnp.sqrt(jnp.sum(v * v, axis=(1, 2), keepdims=True))
    b = 0.1 * jax.random.normal(kb, (COUT,), dtype=jnp.float32)
    wd = 0.3 * jax.random.normal(kwd, (COUT, CIN), dtype=jnp.float32)   # downsample 1x1
    bd = 0.1 * jax.random.normal(kbd, (COUT,), dtype=jnp.float32)

    out = jax.block_until_ready(tcn_block(x, w, b, wd, bd, dilation=D))
    ref = _reference(x, w, b, wd, bd, dilation=D)
    assert out.shape == (B, COUT, L), out.shape
    assert jnp.allclose(out, ref, atol=1e-4, rtol=1e-4), float(jnp.max(jnp.abs(out - ref)))

    # --- Test 2: multi-tile carried causal context + explicit sequence split (halo path) ---
    L2 = 640
    x2 = jax.random.normal(kx2, (B, CIN, L2), dtype=jnp.float32)
    out2 = jax.block_until_ready(
        tcn_block(x2, w, b, wd, bd, dilation=D, time_tile=128, seq_splits=2))
    ref2 = _reference(x2, w, b, wd, bd, dilation=D)
    assert out2.shape == (B, COUT, L2), out2.shape
    assert jnp.allclose(out2, ref2, atol=1e-4, rtol=1e-4), float(jnp.max(jnp.abs(out2 - ref2)))

    # --- Test 3: bf16 compute (f32 accumulate, f32 output), multi N-chunk epilogue ---
    out3 = jax.block_until_ready(
        tcn_block(x2, w, b, wd, bd, dilation=D, compute_dtype=jnp.bfloat16))
    assert out3.shape == (B, COUT, L2), out3.shape
    assert float(jnp.max(jnp.abs(out3 - ref2))) < 0.1, float(jnp.max(jnp.abs(out3 - ref2)))

    # --- Test 4: identity residual (Cin == Cout) + batch-1 auto sequence split ---
    C4, L4 = 8, 512
    x4 = jax.random.normal(kx3, (1, C4, L4), dtype=jnp.float32)
    v4 = 0.3 * jax.random.normal(kv3, (C4, C4, K), dtype=jnp.float32)
    g4 = 1.0 + 0.1 * jax.random.normal(kg3, (C4,), dtype=jnp.float32)
    w4 = g4[:, None, None] * v4 / jnp.sqrt(jnp.sum(v4 * v4, axis=(1, 2), keepdims=True))
    b4 = 0.1 * jax.random.normal(kb3, (C4,), dtype=jnp.float32)
    out4 = jax.block_until_ready(tcn_block(x4, w4, b4, None, None, dilation=D, time_tile=128))
    ref4 = _reference(x4, w4, b4, jnp.eye(C4, dtype=jnp.float32),
                      jnp.zeros((C4,), jnp.float32), dilation=D)
    assert out4.shape == (1, C4, L4), out4.shape
    assert jnp.allclose(out4, ref4, atol=1e-4, rtol=1e-4), float(jnp.max(jnp.abs(out4 - ref4)))

    print("KERNEL_OK")
</pallas_src>

<mosaic_0001>
module attributes {stable_mosaic.version = 11 : i64} {
  func.func @_tcn_kernel(%arg0: i32, %arg1: i32, %arg2: i32, %arg3: memref<1x4x128xf32, #tpu.memory_space<vmem>>, %arg4: memref<1x4x128xf32, #tpu.memory_space<vmem>>, %arg5: memref<8x12xf32, #tpu.memory_space<vmem>>, %arg6: memref<8x4xf32, #tpu.memory_space<vmem>>, %arg7: memref<8x1xf32, #tpu.memory_space<vmem>>, %arg8: memref<8x1xf32, #tpu.memory_space<vmem>>, %arg9: memref<1x8x128xf32, #tpu.memory_space<vmem>>, %arg10: memref<12x128xf32, #tpu.memory_space<vmem>>, %arg11: memref<4x4xf32, #tpu.memory_space<vmem>>) attributes {dimension_semantics = [#tpu.dimension_semantics<parallel>, #tpu.dimension_semantics<parallel>, #tpu.dimension_semantics<arbitrary>], iteration_bounds = array<i64: 1, 2, 1>, scalar_prefetch = 0 : i64, scratch_operands = 2 : i64, tpu.core_type = #tpu.core_type<tc>, window_params = [{transform_indices = @transform_0, window_bounds = array<i64: 1, 4, 128>}, {transform_indices = @transform_1, window_bounds = array<i64: 1, 4, 128>}, {pipeline_mode = #tpu.pipeline_mode<synchronous>, transform_indices = @transform_2, window_bounds = array<i64: 8, 12>}, {pipeline_mode = #tpu.pipeline_mode<synchronous>, transform_indices = @transform_3, window_bounds = array<i64: 8, 4>}, {pipeline_mode = #tpu.pipeline_mode<synchronous>, transform_indices = @transform_4, window_bounds = array<i64: 8, 1>}, {pipeline_mode = #tpu.pipeline_mode<synchronous>, transform_indices = @transform_5, window_bounds = array<i64: 8, 1>}, {transform_indices = @transform_6, window_bounds = array<i64: 1, 8, 128>}]} {
    %c0_i32 = arith.constant 0 : i32
    %0 = arith.cmpi eq, %arg2, %c0_i32 : i32
    %1 = arith.extui %0 : i1 to i32
    %c0_i32_0 = arith.constant 0 : i32
    %2 = arith.cmpi ne, %1, %c0_i32_0 : i32
    scf.if %2 {
      %c0_i32_40 = arith.constant 0 : i32
      %45 = arith.cmpi eq, %arg0, %c0_i32_40 : i32
      %46 = arith.extui %45 : i1 to i32
      %c0_i32_41 = arith.constant 0 : i32
      %47 = arith.cmpi ne, %46, %c0_i32_41 : i32
      scf.if %47 {
        %cst_44 = arith.constant 0.000000e+00 : f32
        %51 = vector.broadcast %cst_44 : f32 to vector<4x4xf32>
        %c0_45 = arith.constant 0 : index
        %c0_46 = arith.constant 0 : index
        %52 = vector.load %arg11[%c0_45, %c0_46] : memref<4x4xf32, #tpu.memory_space<vmem>>, vector<4x4xf32>
        tpu.vector_store %arg11[%c0_45, %c0_46], %51 {strides = array<i32>} : memref<4x4xf32, #tpu.memory_space<vmem>>, vector<4x4xf32>,
      } else {
      }
      %c0_i32_42 = arith.constant 0 : i32
      %48 = arith.cmpi sgt, %arg0, %c0_i32_42 : i32
      %49 = arith.extui %48 : i1 to i32
      %c0_i32_43 = arith.constant 0 : i32
      %50 = arith.cmpi ne, %49, %c0_i32_43 : i32
      scf.if %50 {
        %c0_44 = arith.constant 0 : index
        %c0_45 = arith.constant 0 : index
        %c124_46 = arith.constant 124 : index
        %51 = vector.load %arg4[%c0_44, %c0_45, %c124_46] : memref<1x4x128xf32, #tpu.memory_space<vmem>>, vector<1x4x4xf32>
        %52 = vector.shape_cast %51 : vector<1x4x4xf32> to vector<4x4xf32>
        %c0_47 = arith.constant 0 : index
        %c0_48 = arith.constant 0 : index
        %53 = vector.load %arg11[%c0_47, %c0_48] : memref<4x4xf32, #tpu.memory_space<vmem>>, vector<4x4xf32>
        tpu.vector_store %arg11[%c0_47, %c0_48], %52 {strides = array<i32>} : memref<4x4xf32, #tpu.memory_space<vmem>>, vector<4x4xf32>,
      } else {
      }
    } else {
    }
    %c0 = arith.constant 0 : index
    %c0_1 = arith.constant 0 : index
    %c0_2 = arith.constant 0 : index
    %3 = vector.load %arg3[%c0, %c0_1, %c0_2] : memref<1x4x128xf32, #tpu.memory_space<vmem>>, vector<1x4x128xf32>
    %4 = vector.shape_cast %3 : vector<1x4x128xf32> to vector<4x128xf32>
    %c0_3 = arith.constant 0 : index
    %c0_4 = arith.constant 0 : index
    %5 = vector.load %arg10[%c0_3, %c0_4] : memref<12x128xf32, #tpu.memory_space<vmem>>, vector<4x128xf32>
    tpu.vector_store %arg10[%c0_3, %c0_4], %4 {strides = array<i32>} : memref<12x128xf32, #tpu.memory_space<vmem>>, vector<4x128xf32>,
    %c0_5 = arith.constant 0 : index
    %c2 = arith.constant 2 : index
    %6 = vector.load %arg11[%c0_5, %c2] : memref<4x4xf32, #tpu.memory_space<vmem>>, vector<4x2xf32>
    %c4 = arith.constant 4 : index
    %c0_6 = arith.constant 0 : index
    %7 = vector.load %arg10[%c4, %c0_6] : memref<12x128xf32, #tpu.memory_space<vmem>>, vector<4x2xf32>
    tpu.vector_store %arg10[%c4, %c0_6], %6 {strides = array<i32>} : memref<12x128xf32, #tpu.memory_space<vmem>>, vector<4x2xf32>,
    %c0_7 = arith.constant 0 : index
    %c0_8 = arith.constant 0 : index
    %c0_9 = arith.constant 0 : index
    %8 = vector.load %arg3[%c0_7, %c0_8, %c0_9] : memref<1x4x128xf32, #tpu.memory_space<vmem>>, vector<1x4x126xf32>
    %9 = vector.shape_cast %8 : vector<1x4x126xf32> to vector<4x126xf32>
    %c4_10 = arith.constant 4 : index
    %c2_11 = arith.constant 2 : index
    %10 = vector.load %arg10[%c4_10, %c2_11] : memref<12x128xf32, #tpu.memory_space<vmem>>, vector<4x126xf32>
    tpu.vector_store %arg10[%c4_10, %c2_11], %9 {strides = array<i32>} : memref<12x128xf32, #tpu.memory_space<vmem>>, vector<4x126xf32>,
    %c0_12 = arith.constant 0 : index
    %c0_13 = arith.constant 0 : index
    %11 = vector.load %arg11[%c0_12, %c0_13] : memref<4x4xf32, #tpu.memory_space<vmem>>, vector<4x4xf32>
    %c8 = arith.constant 8 : index
    %c0_14 = arith.constant 0 : index
    %12 = vector.load %arg10[%c8, %c0_14] : memref<12x128xf32, #tpu.memory_space<vmem>>, vector<4x4xf32>
    tpu.vector_store %arg10[%c8, %c0_14], %11 {strides = array<i32>} : memref<12x128xf32, #tpu.memory_space<vmem>>, vector<4x4xf32>,
    %c0_15 = arith.constant 0 : index
    %c0_16 = arith.constant 0 : index
    %c0_17 = arith.constant 0 : index
    %13 = vector.load %arg3[%c0_15, %c0_16, %c0_17] : memref<1x4x128xf32, #tpu.memory_space<vmem>>, vector<1x4x124xf32>
    %14 = vector.shape_cast %13 : vector<1x4x124xf32> to vector<4x124xf32>
    %c8_18 = arith.constant 8 : index
    %c4_19 = arith.constant 4 : index
    %15 = vector.load %arg10[%c8_18, %c4_19] : memref<12x128xf32, #tpu.memory_space<vmem>>, vector<4x124xf32>
    tpu.vector_store %arg10[%c8_18, %c4_19], %14 {strides = array<i32>} : memref<12x128xf32, #tpu.memory_space<vmem>>, vector<4x124xf32>,
    %c0_20 = arith.constant 0 : index
    %c0_21 = arith.constant 0 : index
    %c124 = arith.constant 124 : index
    %16 = vector.load %arg3[%c0_20, %c0_21, %c124] : memref<1x4x128xf32, #tpu.memory_space<vmem>>, vector<1x4x4xf32>
    %17 = vector.shape_cast %16 : vector<1x4x4xf32> to vector<4x4xf32>
    %c0_22 = arith.constant 0 : index
    %c0_23 = arith.constant 0 : index
    %18 = vector.load %arg11[%c0_22, %c0_23] : memref<4x4xf32, #tpu.memory_space<vmem>>, vector<4x4xf32>
    tpu.vector_store %arg11[%c0_22, %c0_23], %17 {strides = array<i32>} : memref<4x4xf32, #tpu.memory_space<vmem>>, vector<4x4xf32>,
    %c0_24 = arith.constant 0 : index
    %c0_25 = arith.constant 0 : index
    %19 = vector.load %arg5[%c0_24, %c0_25] : memref<8x12xf32, #tpu.memory_space<vmem>>, vector<8x12xf32>
    %c0_26 = arith.constant 0 : index
    %c0_27 = arith.constant 0 : index
    %20 = vector.load %arg6[%c0_26, %c0_27] : memref<8x4xf32, #tpu.memory_space<vmem>>, vector<8x4xf32>
    %c0_28 = arith.constant 0 : index
    %c0_29 = arith.constant 0 : index
    %21 = vector.load %arg7[%c0_28, %c0_29] : memref<8x1xf32, #tpu.memory_space<vmem>>, vector<8x1xf32>
    %22 = vector.shape_cast %21 : vector<8x1xf32> to vector<8x1xf32>
    %23 = vector.broadcast %22 : vector<8x1xf32> to vector<8x128xf32>
    %c0_30 = arith.constant 0 : index
    %c0_31 = arith.constant 0 : index
    %24 = vector.load %arg8[%c0_30, %c0_31] : memref<8x1xf32, #tpu.memory_space<vmem>>, vector<8x1xf32>
    %25 = vector.shape_cast %24 : vector<8x1xf32> to vector<8x1xf32>
    %26 = vector.broadcast %25 : vector<8x1xf32> to vector<8x128xf32>
    %c0_i32_32 = arith.constant 0 : i32
    %c128_i32 = arith.constant 128 : i32
    %27 = arith.muli %c0_i32_32, %c128_i32 : i32
    %28 = tpu.assume_multiple %27, 128 : i32
    %c0_33 = arith.constant 0 : index
    %29 = arith.index_cast %28 : i32 to index
    %30 = vector.load %arg10[%c0_33, %29] : memref<12x128xf32, #tpu.memory_space<vmem>>, vector<12x128xf32>
    %c0_34 = arith.constant 0 : index
    %c0_35 = arith.constant 0 : index
    %31 = arith.index_cast %28 : i32 to index
    %32 = vector.load %arg3[%c0_34, %c0_35, %31] : memref<1x4x128xf32, #tpu.memory_space<vmem>>, vector<1x4x128xf32>
    %33 = vector.shape_cast %32 : vector<1x4x128xf32> to vector<4x128xf32>
    %cst = arith.constant dense<0.000000e+00> : vector<8x128xf32>
    %34 = tpu.matmul %19, %30, %cst {dimension_numbers = #tpu.dot_dimension_numbers<[1], [0], [0], [1], [0, 0, 1, 1], [], []>} : vector<8x12xf32>, vector<12x128xf32>, vector<8x128xf32> -> vector<8x128xf32>
    %cst_36 = arith.constant dense<0.000000e+00> : vector<8x128xf32>
    %35 = tpu.matmul %20, %33, %cst_36 {dimension_numbers = #tpu.dot_dimension_numbers<[1], [0], [0], [1], [0, 0, 1, 1], [], []>} : vector<8x4xf32>, vector<4x128xf32>, vector<8x128xf32> -> vector<8x128xf32>
    %36 = arith.addf %34, %23 : vector<8x128xf32>
    %cst_37 = arith.constant 0.000000e+00 : f32
    %37 = vector.broadcast %cst_37 : f32 to vector<8x128xf32>
    %38 = arith.maximumf %36, %37 : vector<8x128xf32>
    %39 = arith.addf %35, %26 : vector<8x128xf32>
    %40 = arith.addf %38, %39 : vector<8x128xf32>
    %c0_38 = arith.constant 0 : index
    %c0_39 = arith.constant 0 : index
    %41 = arith.index_cast %28 : i32 to index
    %42 = vector.load %arg9[%c0_38, %c0_39, %41] : memref<1x8x128xf32, #tpu.memory_space<vmem>>, vector<1x8x128xf32>
    %43 = vector.shape_cast %42 : vector<1x8x128xf32> to vector<8x128xf32>
    %44 = vector.shape_cast %40 : vector<8x128xf32> to vector<1x8x128xf32>
    tpu.vector_store %arg9[%c0_38, %c0_39, %41], %44 {strides = array<i32>} : memref<1x8x128xf32, #tpu.memory_space<vmem>>, vector<1x8x128xf32>,
    %c1_i32 = arith.constant 1 : i32
    return
  }
  func.func @transform_0(%arg0: i32, %arg1: i32, %arg2: i32) -> (i32, i32, i32) {
    %c1_i32 = arith.constant 1 : i32
    %0 = arith.muli %arg0, %c1_i32 : i32
    %1 = arith.addi %0, %arg2 : i32
    %c0_i32 = arith.constant 0 : i32
    %c0_i32_0 = arith.constant 0 : i32
    return %arg1, %c0_i32, %1 : i32, i32, i32
  }
  func.func @transform_1(%arg0: i32, %arg1: i32, %arg2: i32) -> (i32, i32, i32) {
    %c1_i32 = arith.constant 1 : i32
    %0 = arith.muli %arg0, %c1_i32 : i32
    %c1_i32_0 = arith.constant 1 : i32
    %1 = arith.subi %0, %c1_i32_0 : i32
    %c0_i32 = arith.constant 0 : i32
    %2 = arith.maxsi %1, %c0_i32 : i32
    %c0_i32_1 = arith.constant 0 : i32
    %c0_i32_2 = arith.constant 0 : i32
    return %arg1, %c0_i32_1, %2 : i32, i32, i32
  }
  func.func @transform_2(%arg0: i32, %arg1: i32, %arg2: i32) -> (i32, i32) {
    %c0_i32 = arith.constant 0 : i32
    %c0_i32_0 = arith.constant 0 : i32
    %c0_i32_1 = arith.constant 0 : i32
    return %c0_i32, %c0_i32_0 : i32, i32
  }
  func.func @transform_3(%arg0: i32, %arg1: i32, %arg2: i32) -> (i32, i32) {
    %c0_i32 = arith.constant 0 : i32
    %c0_i32_0 = arith.constant 0 : i32
    %c0_i32_1 = arith.constant 0 : i32
    return %c0_i32, %c0_i32_0 : i32, i32
  }
  func.func @transform_4(%arg0: i32, %arg1: i32, %arg2: i32) -> (i32, i32) {
    %c0_i32 = arith.constant 0 : i32
    %c0_i32_0 = arith.constant 0 : i32
    %c0_i32_1 = arith.constant 0 : i32
    return %c0_i32, %c0_i32_0 : i32, i32
  }
  func.func @transform_5(%arg0: i32, %arg1: i32, %arg2: i32) -> (i32, i32) {
    %c0_i32 = arith.constant 0 : i32
    %c0_i32_0 = arith.constant 0 : i32
    %c0_i32_1 = arith.constant 0 : i32
    return %c0_i32, %c0_i32_0 : i32, i32
  }
  func.func @transform_6(%arg0: i32, %arg1: i32, %arg2: i32) -> (i32, i32, i32) {
    %c1_i32 = arith.constant 1 : i32
    %0 = arith.muli %arg0, %c1_i32 : i32
    %1 = arith.addi %0, %arg2 : i32
    %c0_i32 = arith.constant 0 : i32
    %c0_i32_0 = arith.constant 0 : i32
    return %arg1, %c0_i32, %1 : i32, i32, i32
  }
}

</mosaic_0001>

<llo_original>
// kernel: tcn_block.1
$region0: #{tcn_block.1}
  #allocation0 [shape = 'u32[]', space=smem, size = 0x4, offset = 0x4, fixed_abs, tag = 'smem constant byte address 0x4 - core index']
  #allocation1 [shape = 'u32[72,128]{1,0:T(1,128)}', space=vmem, size = 0x9000, scoped, tag = 'internal scratch']
  #allocation2 [shape = 'f32[12,128]{1,0:T(8,128)}', space=vmem, size = 0x2000, scoped, tag = 'scratch operand']
  #allocation3 [shape = 'f32[4,4]{1,0:T(4,128)}', space=vmem, size = 0x800, scoped, tag = 'scratch operand']
  %s0 = inlined_call_operand.vmem [shape: f32[2,4,128], index: 0, kind: input, shape index: {}, may-alias: {0,1}]
  %s1 = inlined_call_operand.vmem [shape: f32[2,4,128], index: 1, kind: input, shape index: {}, may-alias: {0,1}]
  %s2 = inlined_call_operand.vmem [shape: f32[8,12], index: 2, kind: input, shape index: {}]
  %s3 = inlined_call_operand.vmem [shape: f32[8,4], index: 3, kind: input, shape index: {}]
  %s4 = inlined_call_operand.vmem [shape: f32[8,1], index: 4, kind: input, shape index: {}]
  %s5 = inlined_call_operand.vmem [shape: f32[8,1], index: 5, kind: input, shape index: {}]
  %s6 = inlined_call_operand.hbm [shape: f32[2,8,128], index: 6, kind: output, shape index: {}]
  %s7 = sld [smem:[#allocation0]]
  $region69: #{tcn_block.1} parent=0
    _
  %s9 = ssub.s32 1, %s7
  %s10 = scalar_select 0, %s9, %s7
  $region1: #{tcn_block.1} parent=0
    #allocation4 [shape = 'u8[8192]{0}', space=vmem, size = 0x2000, scoped, tag = 'output window, operand 0']
    #allocation5 [shape = 's32[2]{0}', space=sflag, size = 0x8, scoped, tag = 'scoped memory for tcn_block.1']
    %11 = vsyncpa [#allocation5], 0
    %s12 = scalar_lea.sflag [#allocation5], 1
    %13 = vsyncpa %s12, 0
    loop: start=0, step=1, limit=4
    $region2: #{tcn_block.1} parent=1 // loop_pre_header
      _
    $region3: #{tcn_block.1} parent=1 // loop_header
      %s15 = sphi 0, %s19
      %p16 = scmp.ge.s32.totalorder %s15, 4
      %s22 = sphi 0, %s41
      %s23 = sphi 0, %s37
      %s24 = sphi 0, %s33
      %s25 = sphi 0, %s22
      %s26 = sphi 0, %s23
      %s27 = sphi 0, %s24
      %s28 = sphi 0, %s25
      %s29 = sphi 0, %s26
      %s30 = sphi 0, %s27
      %s48 = sphi 0, %s50
      %s51 = sphi 0, %s48
      %s52 = sphi 0, %s51
      %s68 = sphi 0, %s52
      %s82 = sphi 0, %s84
      %s85 = sphi 0, %s82
      %s86 = sphi 0, %s85
      %s102 = sphi 0, %s86
      %s106 = sphi 0, %s106
      %s108 = sphi 0, %s106
      %s109 = sphi 0, %s108
      %s123 = sphi 0, %s109
      %s127 = sphi 0, %s127
      %s129 = sphi 0, %s127
      %s130 = sphi 0, %s129
      %s144 = sphi 0, %s130
      %s148 = sphi 0, %s148
      %s150 = sphi 0, %s148
      %s151 = sphi 0, %s150
      %s165 = sphi 0, %s151
      %s169 = sphi 0, %s169
      %s171 = sphi 0, %s169
      %s172 = sphi 0, %s171
      %s186 = sphi 0, %s172
      %s196 = sphi 0, %s198
      %s199 = sphi 0, %s196
      %s200 = sphi 0, %s199
      %s216 = sphi 0, %s200
    $region4: #{tcn_block.1} parent=1 // loop_header_branch
      %18 = sbr.rel (%p16) target = $region8
    $region5: #{tcn_block.1} parent=1 // loop_body
      %s20 = ssub.s32 %s15, 1
      %s21 = ssub.s32 %s15, 2
      %s31 = sadd.s32 1, %s24
      %p32 = scmp.ge.s32.totalorder %s31, 1
      %s33 = scalar_select %p32, 0, %s31
      %s34 = sadd.s32 1, %s23
      %s35 = scalar_select %p32, %s34, %s23
      %p36 = scmp.ge.s32.totalorder %s35, 2
      %s37 = scalar_select %p36, 0, %s35
      %s38 = sadd.s32 1, %s22
      %s39 = scalar_select %p36, %s38, %s22
      %p40 = scmp.ge.s32.totalorder %s39, 1
      %s41 = scalar_select %p40, 0, %s39
      %s42 = sadd.s32 %s22, %s24
      %s43 = sadd.s32 %s41, %s33
      %s44 = ssub.s32 %s23, %s37
      %s45 = ssub.s32 %s42, %s43
      %s46 = sor.u32 %s44, %s45
      %p47 = scmp.eq.s32.totalorder %s46, 0
      %s49 = sadd.s32 %s48, 1
      %s50 = scalar_select %p47, %s48, %s49
      %p53 = pneg %p47
      %p54 = scmp.eq.s32.totalorder %s15, 1
      %p55 = por %p53, %p54
      %p56 = scmp.ne.s32.totalorder %s48, %s51
      %p57 = scmp.eq.s32.totalorder %s15, 0
      %p58 = por %p56, %p57
      %p59 = scmp.ne.s32.totalorder %s48, %s51
      %p60 = scmp.eq.s32.totalorder %s20, 1
      %p61 = por %p59, %p60
      %p62 = scmp.ne.s32.totalorder %s51, %s52
      %p63 = scmp.eq.s32.totalorder %s20, 0
      %p64 = por %p62, %p63
      %p65 = scmp.ne.s32.totalorder %s51, %s52
      %p66 = scmp.eq.s32.totalorder %s21, 1
      %p67 = por %p65, %p66
      %p69 = scmp.ne.s32.totalorder %s52, %s68
      %p70 = scmp.eq.s32.totalorder %s21, 0
      %p71 = por %p69, %p70
      %s72 = ssub.s32 %s22, 1
      %p73 = scmp.gt.s32.totalorder %s72, 0
      %s74 = scalar_select %p73, %s72, 0
      %s75 = ssub.s32 %s41, 1
      %p76 = scmp.gt.s32.totalorder %s75, 0
      %s77 = scalar_select %p76, %s75, 0
      %s78 = ssub.s32 %s23, %s37
      %s79 = ssub.s32 %s74, %s77
      %s80 = sor.u32 %s78, %s79
      %p81 = scmp.eq.s32.totalorder %s80, 0
      %s83 = sadd.s32 %s82, 1
      %s84 = scalar_select %p81, %s82, %s83
      %p87 = pneg %p81
      %p88 = scmp.eq.s32.totalorder %s15, 1
      %p89 = por %p87, %p88
      %p90 = scmp.ne.s32.totalorder %s82, %s85
      %p91 = scmp.eq.s32.totalorder %s15, 0
      %p92 = por %p90, %p91
      %p93 = scmp.ne.s32.totalorder %s82, %s85
      %p94 = scmp.eq.s32.totalorder %s20, 1
      %p95 = por %p93, %p94
      %p96 = scmp.ne.s32.totalorder %s85, %s86
      %p97 = scmp.eq.s32.totalorder %s20, 0
      %p98 = por %p96, %p97
      %p99 = scmp.ne.s32.totalorder %s85, %s86
      %p100 = scmp.eq.s32.totalorder %s21, 1
      %p101 = por %p99, %p100
      %p103 = scmp.ne.s32.totalorder %s86, %s102
      %p104 = scmp.eq.s32.totalorder %s21, 0
      %p105 = por %p103, %p104
      %s107 = sadd.s32 %s106, 1
      %p110 = scmp.eq.s32.totalorder %s15, 1
      %p111 = scmp.ne.s32.totalorder %s106, %s108
      %p112 = scmp.eq.s32.totalorder %s15, 0
      %p113 = por %p111, %p112
      %p114 = scmp.ne.s32.totalorder %s106, %s108
      %p115 = scmp.eq.s32.totalorder %s20, 1
      %p116 = por %p114, %p115
      %p117 = scmp.ne.s32.totalorder %s108, %s109
      %p118 = scmp.eq.s32.totalorder %s20, 0
      %p119 = por %p117, %p118
      %p120 = scmp.ne.s32.totalorder %s108, %s109
      %p121 = scmp.eq.s32.totalorder %s21, 1
      %p122 = por %p120, %p121
      %p124 = scmp.ne.s32.totalorder %s109, %s123
      %p125 = scmp.eq.s32.totalorder %s21, 0
      %p126 = por %p124, %p125
      %s128 = sadd.s32 %s127, 1
      %p131 = scmp.eq.s32.totalorder %s15, 1
      %p132 = scmp.ne.s32.totalorder %s127, %s129
      %p133 = scmp.eq.s32.totalorder %s15, 0
      %p134 = por %p132, %p133
      %p135 = scmp.ne.s32.totalorder %s127, %s129
      %p136 = scmp.eq.s32.totalorder %s20, 1
      %p137 = por %p135, %p136
      %p138 = scmp.ne.s32.totalorder %s129, %s130
      %p139 = scmp.eq.s32.totalorder %s20, 0
      %p140 = por %p138, %p139
      %p141 = scmp.ne.s32.totalorder %s129, %s130
      %p142 = scmp.eq.s32.totalorder %s21, 1
      %p143 = por %p141, %p142
      %p145 = scmp.ne.s32.totalorder %s130, %s144
      %p146 = scmp.eq.s32.totalorder %s21, 0
      %p147 = por %p145, %p146
      %s149 = sadd.s32 %s148, 1
      %p152 = scmp.eq.s32.totalorder %s15, 1
      %p153 = scmp.ne.s32.totalorder %s148, %s150
      %p154 = scmp.eq.s32.totalorder %s15, 0
      %p155 = por %p153, %p154
      %p156 = scmp.ne.s32.totalorder %s148, %s150
      %p157 = scmp.eq.s32.totalorder %s20, 1
      %p158 = por %p156, %p157
      %p159 = scmp.ne.s32.totalorder %s150, %s151
      %p160 = scmp.eq.s32.totalorder %s20, 0
      %p161 = por %p159, %p160
      %p162 = scmp.ne.s32.totalorder %s150, %s151
      %p163 = scmp.eq.s32.totalorder %s21, 1
      %p164 = por %p162, %p163
      %p166 = scmp.ne.s32.totalorder %s151, %s165
      %p167 = scmp.eq.s32.totalorder %s21, 0
      %p168 = por %p166, %p167
      %s170 = sadd.s32 %s169, 1
      %p173 = scmp.eq.s32.totalorder %s15, 1
      %p174 = scmp.ne.s32.totalorder %s169, %s171
      %p175 = scmp.eq.s32.totalorder %s15, 0
      %p176 = por %p174, %p175
      %p177 = scmp.ne.s32.totalorder %s169, %s171
      %p178 = scmp.eq.s32.totalorder %s20, 1
      %p179 = por %p177, %p178
      %p180 = scmp.ne.s32.totalorder %s171, %s172
      %p181 = scmp.eq.s32.totalorder %s20, 0
      %p182 = por %p180, %p181
      %p183 = scmp.ne.s32.totalorder %s171, %s172
      %p184 = scmp.eq.s32.totalorder %s21, 1
      %p185 = por %p183, %p184
      %p187 = scmp.ne.s32.totalorder %s172, %s186
      %p188 = scmp.eq.s32.totalorder %s21, 0
      %p189 = por %p187, %p188
      %s190 = sadd.s32 %s22, %s24
      %s191 = sadd.s32 %s41, %s33
      %s192 = ssub.s32 %s23, %s37
      %s193 = ssub.s32 %s190, %s191
      %s194 = sor.u32 %s192, %s193
      %p195 = scmp.eq.s32.totalorder %s194, 0
      %s197 = sadd.s32 %s196, 1
      %s198 = scalar_select %p195, %s196, %s197
      %p201 = pneg %p195
      %p202 = scmp.eq.s32.totalorder %s15, 1
      %p203 = por %p201, %p202
      %p204 = scmp.ne.s32.totalorder %s196, %s199
      %p205 = scmp.eq.s32.totalorder %s15, 0
      %p206 = por %p204, %p205
      %p207 = scmp.ne.s32.totalorder %s196, %s199
      %p208 = scmp.eq.s32.totalorder %s20, 1
      %p209 = por %p207, %p208
      %p210 = scmp.ne.s32.totalorder %s199, %s200
      %p211 = scmp.eq.s32.totalorder %s20, 0
      %p212 = por %p210, %p211
      %p213 = scmp.ne.s32.totalorder %s199, %s200
      %p214 = scmp.eq.s32.totalorder %s21, 1
      %p215 = por %p213, %p214
      %p217 = scmp.ne.s32.totalorder %s200, %s216
      %p218 = scmp.eq.s32.totalorder %s21, 0
      %p219 = por %p217, %p218
      %p220 = scmp.le.s32.totalorder 1, %s15
      %p221 = scmp.lt.s32.totalorder %s15, 3
      %p222 = pnand %p220, %p221
      %p223 = pneg %p222
      // Predicated region
      $region9: #{tcn_block.1} parent=5 // pred_check
        _
      $region10: #{tcn_block.1} parent=5 // pred_check_branch
        %225 = sbr.rel (%p222) target = $region12
      $region11: #{tcn_block.1} parent=5 // pred_region
        %s226 = ssub.s32 %s15, 1
        // Predicated region
        $region13: #{tcn_block.1} parent=11 // pred_check
          %p227 = pneg %p119
        $region14: #{tcn_block.1} parent=11 // pred_check_branch
          %229 = sbr.rel (%p227) target = $region16
        $region15: #{tcn_block.1} parent=11 // pred_region
          _
        $region16: #{tcn_block.1} parent=11 // pred_fallthru
          _
        // Predicated region
        $region17: #{tcn_block.1} parent=11 // pred_check
          %p230 = pneg %p140
        $region18: #{tcn_block.1} parent=11 // pred_check_branch
          %232 = sbr.rel (%p230) target = $region20
        $region19: #{tcn_block.1} parent=11 // pred_region
          _
        $region20: #{tcn_block.1} parent=11 // pred_fallthru
          _
        // Predicated region
        $region21: #{tcn_block.1} parent=11 // pred_check
          %p233 = pneg %p161
        $region22: #{tcn_block.1} parent=11 // pred_check_branch
          %235 = sbr.rel (%p233) target = $region24
        $region23: #{tcn_block.1} parent=11 // pred_region
          _
        $region24: #{tcn_block.1} parent=11 // pred_fallthru
          _
        // Predicated region
        $region25: #{tcn_block.1} parent=11 // pred_check
          %p236 = pneg %p182
        $region26: #{tcn_block.1} parent=11 // pred_check_branch
          %238 = sbr.rel (%p236) target = $region28
        $region27: #{tcn_block.1} parent=11 // pred_region
          _
        $region28: #{tcn_block.1} parent=11 // pred_fallthru
          _
      $region12: #{tcn_block.1} parent=5 // pred_fallthru
        _
      %p239 = scmp.lt.s32.totalorder %s15, 2
      // Predicated region
      $region29: #{tcn_block.1} parent=5 // pred_check
        %p240 = pneg %p239
      $region30: #{tcn_block.1} parent=5 // pred_check_branch
        %242 = sbr.rel (%p240) target = $region32
      $region31: #{tcn_block.1} parent=5 // pred_region
        // Predicated region
        $region33: #{tcn_block.1} parent=31 // pred_check
          %p243 = pneg %p58
        $region34: #{tcn_block.1} parent=31 // pred_check_branch
          %245 = sbr.rel (%p243) target = $region36
        $region35: #{tcn_block.1} parent=31 // pred_region
          %s246 = sadd.s32 %s22, %s24
          %p247 = scmp.lt.s32.totalorder %s23, 1
          %s248 = scalar_select %p247, %s23, 1
          %p249 = scmp.lt.s32.totalorder %s246, 0
          %s250 = scalar_select %p249, %s246, 0
          %s251 = sadd.s32 %s250, %s248
          %s252 = smul.addr %s251, 4
          %s253 = scalar_lea.vmem %s0, %s252
          %s254 = sadd.s32 %s22, %s24
        $region36: #{tcn_block.1} parent=31 // pred_fallthru
          _
        // Predicated region
        $region37: #{tcn_block.1} parent=31 // pred_check
          %p255 = pneg %p92
        $region38: #{tcn_block.1} parent=31 // pred_check_branch
          %257 = sbr.rel (%p255) target = $region40
        $region39: #{tcn_block.1} parent=31 // pred_region
          %s258 = ssub.s32 %s22, 1
          %p259 = scmp.gt.s32.totalorder %s258, 0
          %s260 = scalar_select %p259, %s258, 0
          %p261 = scmp.lt.s32.totalorder %s23, 1
          %s262 = scalar_select %p261, %s23, 1
          %p263 = scmp.lt.s32.totalorder %s260, 0
          %s264 = scalar_select %p263, %s260, 0
          %s265 = sadd.s32 %s264, %s262
          %s266 = smul.addr %s265, 4
          %s267 = scalar_lea.vmem %s1, %s266
          %s268 = ssub.s32 %s22, 1
          %p269 = scmp.gt.s32.totalorder %s268, 0
          %s270 = scalar_select %p269, %s268, 0
        $region40: #{tcn_block.1} parent=31 // pred_fallthru
          _
      $region32: #{tcn_block.1} parent=5 // pred_fallthru
        _
      %p271 = scmp.le.s32.totalorder 1, %s15
      %p272 = scmp.lt.s32.totalorder %s15, 3
      %p273 = pnand %p271, %p272
      %p274 = pneg %p273
      // Predicated region
      $region41: #{tcn_block.1} parent=5 // pred_check
        _
      $region42: #{tcn_block.1} parent=5 // pred_check_branch
        %276 = sbr.rel (%p273) target = $region44
      $region43: #{tcn_block.1} parent=5 // pred_region
        %s277 = ssub.s32 %s15, 1
        %s278 = sadd.s32 %s25, %s27
        %p279 = scmp.lt.s32.totalorder %s26, 1
        %s280 = scalar_select %p279, %s26, 1
        %p281 = scmp.lt.s32.totalorder %s278, 0
        %s282 = scalar_select %p281, %s278, 0
        %s283 = sadd.s32 %s282, %s280
        %s284 = smul.addr %s283, 4
        %s285 = scalar_lea.vmem %s0, %s284
        %p286 = pneg %p64
        %p287 = pneg %p61
        %s288 = ssub.s32 %s25, 1
        %p289 = scmp.gt.s32.totalorder %s288, 0
        %s290 = scalar_select %p289, %s288, 0
        %p291 = scmp.lt.s32.totalorder %s26, 1
        %s292 = scalar_select %p291, %s26, 1
        %p293 = scmp.lt.s32.totalorder %s290, 0
        %s294 = scalar_select %p293, %s290, 0
        %s295 = sadd.s32 %s294, %s292
        %s296 = smul.addr %s295, 4
        %s297 = scalar_lea.vmem %s1, %s296
        %p298 = pneg %p98
        %p299 = pneg %p95
        %p300 = pneg %p119
        %p301 = pneg %p116
        %p302 = pneg %p140
        %p303 = pneg %p137
        %p304 = pneg %p161
        %p305 = pneg %p158
        %p306 = pneg %p182
        %p307 = pneg %p179
        %p308 = pneg %p212
        %p309 = pneg %p209
        %s310 = sand.u32 %s199, 1
        %s311 = scalar_lea.sflag [#allocation5], %s310
        %s312 = sand.u32 %s199, 1
        %s313 = smul.addr %s312, 8
        %s314 = scalar_lea.vmem [#allocation4], %s313
        %s315 = sadd.s32 %s25, %s27
        %p316 = scmp.lt.s32.totalorder %s26, 1
        %s317 = scalar_select %p316, %s26, 1
        %p318 = scmp.lt.s32.totalorder %s315, 0
        %s319 = scalar_select %p318, %s315, 0
        %s320 = sadd.s32 %s319, %s317
        %s321 = smul.addr %s320, 4
        %s322 = scalar_lea.vmem %s0, %s321
        %s323 = sadd.s32 %s25, %s27
        %s324 = ssub.s32 %s25, 1
        %p325 = scmp.gt.s32.totalorder %s324, 0
        %s326 = scalar_select %p325, %s324, 0
        %p327 = scmp.lt.s32.totalorder %s26, 1
        %s328 = scalar_select %p327, %s26, 1
        %p329 = scmp.lt.s32.totalorder %s326, 0
        %s330 = scalar_select %p329, %s326, 0
        %s331 = sadd.s32 %s330, %s328
        %s332 = smul.addr %s331, 4
        %s333 = scalar_lea.vmem %s1, %s332
        %s334 = ssub.s32 %s25, 1
        %p335 = scmp.gt.s32.totalorder %s334, 0
        %s336 = scalar_select %p335, %s334, 0
        %s337 = sadd.s32 %s25, %s27
        %p338 = scmp.eq.s32.totalorder %s27, 0
        // Predicated region
        $region45: #{tcn_block.1} parent=43 // pred_check
          %p339 = pneg %p338
        $region46: #{tcn_block.1} parent=43 // pred_check_branch
          %341 = sbr.rel (%p339) target = $region48
        $region47: #{tcn_block.1} parent=43 // pred_region
          %p342 = scmp.eq.s32.totalorder %s25, 0
          // Predicated region
          $region49: #{tcn_block.1} parent=47 // pred_check
            %p343 = pneg %p342
          $region50: #{tcn_block.1} parent=47 // pred_check_branch
            %345 = sbr.rel (%p343) target = $region52
          $region51: #{tcn_block.1} parent=47 // pred_region
            %vm346 = vcmask 27648
            %347 = vst.msk [vmem:[#allocation3] sm:$0xf] %vm346, 0.0
          $region52: #{tcn_block.1} parent=47 // pred_fallthru
            _
          %p348 = scmp.gt.s32.totalorder %s25, 0
          // Predicated region
          $region53: #{tcn_block.1} parent=47 // pred_check
            %p349 = pneg %p348
          $region54: #{tcn_block.1} parent=47 // pred_check_branch
            %351 = sbr.rel (%p349) target = $region56
          $region55: #{tcn_block.1} parent=47 // pred_region
            %v352 = vld [vmem:[%s333] sm:$0xf]
            %354 = vrot.lane.b32.xlu0 %v352, 4
            %v355 = vpop.permute.xlu0 %354
            %vm357 = vcmask 27648
            %358 = vst.msk [vmem:[#allocation3] sm:$0xf] %vm357, %v355
          $region56: #{tcn_block.1} parent=47 // pred_fallthru
            _
        $region48: #{tcn_block.1} parent=43 // pred_fallthru
          _
        %v359 = vld [vmem:[%s322] sm:$0xf]
        %360 = vst [vmem:[#allocation2] sm:$0xf] %v359
        %v361 = vld [vmem:[#allocation3] sm:$0xf]
        %363 = vrot.lane.b32.xlu0 %v361, 126
        %v364 = vpop.permute.xlu0 %363
        %vm366 = vcmask 11264
        %367 = vst.msk [vmem:[#allocation2 + $0x4] sm:$0xf] %vm366, %v364
        %v368 = vld [vmem:[%s322] sm:$0xf]
        %370 = vrot.lane.b32.xlu0 %v368, 2
        %v371 = vpop.permute.xlu0 %370
        %vm373 = vcmask 1043472
        %374 = vst.msk [vmem:[#allocation2 + $0x4] sm:$0xf] %vm373, %v371
        %v375 = vld [vmem:[#allocation3] sm:$0xf]
        %vm376 = vcmask 27648
        %377 = vst.msk [vmem:[#allocation2 + $0x8] sm:$0xf] %vm376, %v375
        %v378 = vld [vmem:[%s322] sm:$0xf]
        %380 = vrot.lane.b32.xlu0 %v378, 4
        %v381 = vpop.permute.xlu0 %380
        %vm383 = vcmask 1043488
        %384 = vst.msk [vmem:[#allocation2 + $0x8] sm:$0xf] %vm383, %v381
        %v385 = vld [vmem:[%s322] sm:$0xf]
        %387 = vrot.lane.b32.xlu0 %v385, 4
        %v388 = vpop.permute.xlu0 %387
        %390 = vst.msk [vmem:[#allocation3] sm:$0xf] %vm376, %v388
        %v391 = vld [vmem:[%s2] sm:$0xff]
        %v392 = vld [vmem:[%s3] sm:$0xff]
        %v393 = vld [vmem:[%s4] sm:$0xff]
        %395 = vset.pattern.permute.xlu0 0
        %396 = vperm.xlu0 %395, %v393
        %v397 = vpop.permute.xlu0 %396
        %v399 = vld [vmem:[%s5] sm:$0xff]
        %401 = vset.pattern.permute.xlu0 0
        %402 = vperm.xlu0 %401, %v399
        %v403 = vpop.permute.xlu0 %402
        %v405 = vld [vmem:[#allocation2] sm:$0xff]
        %v406 = vld [vmem:[#allocation2 + $0x8] sm:$0xf]
        %v407 = vld [vmem:[%s322] sm:$0xf]
        %vm408 = vcmask 97280
        %v410 = vsel %vm408, %v391, 0
        %vm412 = vcmask 1043456
        %v414 = vsel %vm412, %v406, 0
        %416 = vmatpush.msra.mxu0 0.0
        %417 = vmatpush.msra.mxu0 0.0
        %418 = vmatpush.msra.mxu0 0.0
        %419 = vmatpush.msra.mxu0 0.0
        %420 = vmatpush.msra.mxu0 0.0
        %421 = vmatpush.msra.mxu0 0.0
        %422 = vmatpush.msra.mxu0 0.0
        %423 = vmatpush.msra.mxu0 0.0
        %424 = vmatpush.msra.mxu0 0.0
        %425 = vmatpush.msra.mxu0 0.0
        %426 = vmatpush.msra.mxu0 0.0
        %427 = vmatpush.msra.mxu0 0.0
        %428 = vmatpush.msra.mxu0 0.0
        %429 = vmatpush.msra.mxu0 0.0
        %430 = vmatpush.msra.mxu0 %v414
        %431 = vmatpush.msra.mxu0 %v405
        %432 = vmatmul.f32.gmra.mxu0 %v410
        %v433 = vpop.f32.mrf.mxu0
        %v434 = vadd.f32 %v397, %v433
        %435 = vdwg.mxu0
        %v436 = vmax.f32 %v434, 0.0
        %vm437 = vcmask 31744
        %v439 = vsel %vm437, %v392, 0
        %v442 = vsel %vm412, %v407, 0
        %444 = vmatpush.msra.mxu0 0.0
        %445 = vmatpush.msra.mxu0 0.0
        %446 = vmatpush.msra.mxu0 0.0
        %447 = vmatpush.msra.mxu0 0.0
        %448 = vmatpush.msra.mxu0 0.0
        %449 = vmatpush.msra.mxu0 0.0
        %450 = vmatpush.msra.mxu0 0.0
        %451 = vmatpush.msra.mxu0 0.0
        %452 = vmatpush.msra.mxu0 0.0
        %453 = vmatpush.msra.mxu0 0.0
        %454 = vmatpush.msra.mxu0 0.0
        %455 = vmatpush.msra.mxu0 0.0
        %456 = vmatpush.msra.mxu0 0.0
        %457 = vmatpush.msra.mxu0 0.0
        %458 = vmatpush.msra.mxu0 0.0
        %459 = vmatpush.msra.mxu0 %v442
        %460 = vmatmul.f32.gmra.mxu0 %v439
        %v461 = vpop.f32.mrf.mxu0
        %v462 = vadd.f32 %v403, %v461
        %463 = vdwg.mxu0
        %v464 = vadd.f32 %v436, %v462
        %465 = vst [vmem:[%s314] sm:$0xff] %v464
        %s466 = sand.u32 %s199, 1
        %s467 = scalar_lea.sflag [#allocation5], %s466
        %s468 = sand.u32 %s199, 1
        %s469 = smul.addr %s468, 8
        %s470 = scalar_lea.vmem [#allocation4], %s469
        // Predicated region
        $region57: #{tcn_block.1} parent=43 // pred_check
          %p471 = pneg %p209
        $region58: #{tcn_block.1} parent=43 // pred_check_branch
          %473 = sbr.rel (%p471) target = $region60
        $region59: #{tcn_block.1} parent=43 // pred_region
          %s474 = sadd.s32 %s25, %s27
          %476 = vsyncadd %s467, 0
          %s477 = sadd.s32 %s474, %s26
          %s478 = smul.addr %s477, 8
          %s479 = scalar_lea.hbm %s6, %s478
          %s481 = sshll.u32 %s470, 4
          %s482 = int_to_ptr.vmem [resolvable:$true] %s481
          %s483 = sshll.u32 %s479, 4
          %s484 = int_to_ptr.hbm [resolvable:$true] %s483
          %486 = dma.vmem_to_hbm [thread:$0]  %s482, 128, %s484, %s467
        $region60: #{tcn_block.1} parent=43 // pred_fallthru
          _
      $region44: #{tcn_block.1} parent=5 // pred_fallthru
        _
      %p487 = scmp.le.s32.totalorder 2, %s15
      // Predicated region
      $region61: #{tcn_block.1} parent=5 // pred_check
        %p488 = pneg %p487
      $region62: #{tcn_block.1} parent=5 // pred_check_branch
        %490 = sbr.rel (%p488) target = $region64
      $region63: #{tcn_block.1} parent=5 // pred_region
        %s491 = ssub.s32 %s15, 2
        // Predicated region
        $region65: #{tcn_block.1} parent=63 // pred_check
          %p492 = pneg %p215
        $region66: #{tcn_block.1} parent=63 // pred_check_branch
          %494 = sbr.rel (%p492) target = $region68
        $region67: #{tcn_block.1} parent=63 // pred_region
          %s495 = sand.u32 %s200, 1
          %s496 = scalar_lea.sflag [#allocation5], %s495
          %s497 = sand.u32 %s200, 1
          %s498 = smul.addr %s497, 8
          %s499 = scalar_lea.vmem [#allocation4], %s498
          %501 = dma.done %s496, 128
        $region68: #{tcn_block.1} parent=63 // pred_fallthru
          _
      $region64: #{tcn_block.1} parent=5 // pred_fallthru
        _
    $region6: #{tcn_block.1} parent=1 // loop_footer
      %s19 = sadd.s32 1, %s15
    $region7: #{tcn_block.1} parent=1 // loop_footer_branch
      %14 = sbr.rel target = $region3
    $region8: #{tcn_block.1} parent=1 // loop_exit
      _
    %502 = vsyncpa [#allocation5], 1
    %s503 = scalar_lea.sflag [#allocation5], 1
    %504 = vsyncpa %s503, 1

</llo_original>
